<compile_context>
chip_gen: v7x
topology: tpu7x:2x2x1
jax: 0.10.0
libtpu: 0.0.40
codegen_flags: <defaults>
</compile_context>

<pallas_src>
import functools
import math

import jax
import jax.numpy as jnp
from jax.experimental import pallas as pl
from jax.experimental.pallas import tpu as pltpu

_MIB = 1024 * 1024


# --------------------------------------------------------------------------
# In-kernel helpers (all arrays are 2-D: (rows, lanes)).
# --------------------------------------------------------------------------
def _fold_groups(v, group):
    """Sum the `group` spatial positions packed along the lane axis.

    v: (1, L) per-lane partial sums with L = group * C (lane = g*C + c).
    Returns, at every lane, the total over all lanes in the same residue class
    mod C (the per-channel total, replicated across all groups).  Cyclic
    roll-doubling tree; roll direction is irrelevant.
    """
    L = v.shape[-1]
    shift = L // group
    g = group
    while g > 1:
        v = v + pltpu.roll(v, shift, 1)
        shift *= 2
        g //= 2
    return v


def _coeffs(s_r, s_i, s_rr, s_ii, s_ri, *, inv_count, epsilon, group):
    """Whitening coefficients (mu_r, mu_i, p, q, s) from raw moments, (1, L)."""
    s_r = _fold_groups(s_r, group)
    s_i = _fold_groups(s_i, group)
    s_rr = _fold_groups(s_rr, group)
    s_ii = _fold_groups(s_ii, group)
    s_ri = _fold_groups(s_ri, group)

    mu_r = s_r * inv_count
    mu_i = s_i * inv_count
    # Raw-moment covariances; clamp variances at 0 and det at a positive floor
    # to guard float32 cancellation when |mean| >> std.
    cov_uu = jnp.maximum(s_rr * inv_count - mu_r * mu_r, 0.0) + epsilon
    cov_vv = jnp.maximum(s_ii * inv_count - mu_i * mu_i, 0.0) + epsilon
    cov_uv = s_ri * inv_count - mu_r * mu_i

    det = jnp.maximum(cov_uu * cov_vv - cov_uv * cov_uv, 1e-37)
    rdet = jax.lax.rsqrt(det)
    sqrdet = det * rdet                                   # sqrt(det)
    inv_denom = rdet * jax.lax.rsqrt(cov_uu + cov_vv + 2.0 * sqrdet)
    p = (cov_vv + sqrdet) * inv_denom
    s = (cov_uu + sqrdet) * inv_denom
    q = -cov_uv * inv_denom                               # == r
    return mu_r, mu_i, p, q, s


# --------------------------------------------------------------------------
# Kernels
# --------------------------------------------------------------------------
def _whiten_kernel(xr_ref, xi_ref, or_ref, oi_ref, *, epsilon, group, inv_count):
    """Single-pass kernel: whole spatial extent resident in the block."""
    xr = xr_ref[...]                                      # (R, LT) float32
    xi = xi_ref[...]
    s_r = jnp.sum(xr, axis=0, keepdims=True)
    s_i = jnp.sum(xi, axis=0, keepdims=True)
    s_rr = jnp.sum(xr * xr, axis=0, keepdims=True)
    s_ii = jnp.sum(xi * xi, axis=0, keepdims=True)
    s_ri = jnp.sum(xr * xi, axis=0, keepdims=True)
    mu_r, mu_i, p, q, s = _coeffs(s_r, s_i, s_rr, s_ii, s_ri,
                                  inv_count=inv_count, epsilon=epsilon,
                                  group=group)
    xr_c = xr - mu_r
    xi_c = xi - mu_i
    or_ref[...] = xr_c * p + xi_c * q
    oi_ref[...] = xr_c * q + xi_c * s


def _moments_kernel(xr_ref, xi_ref,
                    mur_ref, mui_ref, p_ref, q_ref, s_ref,
                    a_r, a_i, a_rr, a_ii, a_ri, *,
                    epsilon, group, inv_count, rows_total, rows_per_block):
    """Pass A of the two-pass path: accumulate raw moments over spatial tiles
    and emit the whitening coefficients once per (batch, lane-tile)."""
    sidx = pl.program_id(2)

    @pl.when(sidx == 0)
    def _init():
        a_r[...] = jnp.zeros_like(a_r)
        a_i[...] = jnp.zeros_like(a_i)
        a_rr[...] = jnp.zeros_like(a_rr)
        a_ii[...] = jnp.zeros_like(a_ii)
        a_ri[...] = jnp.zeros_like(a_ri)

    xr = xr_ref[...]                                      # (RT, LT)
    xi = xi_ref[...]
    row = jax.lax.broadcasted_iota(jnp.int32, xr.shape, 0)
    valid = row + sidx * rows_per_block < rows_total      # mask padded rows
    xr = jnp.where(valid, xr, 0.0)
    xi = jnp.where(valid, xi, 0.0)
    a_r[...] += jnp.sum(xr, axis=0, keepdims=True)
    a_i[...] += jnp.sum(xi, axis=0, keepdims=True)
    a_rr[...] += jnp.sum(xr * xr, axis=0, keepdims=True)
    a_ii[...] += jnp.sum(xi * xi, axis=0, keepdims=True)
    a_ri[...] += jnp.sum(xr * xi, axis=0, keepdims=True)

    @pl.when(sidx == pl.num_programs(2) - 1)
    def _finalize():
        mu_r, mu_i, p, q, s = _coeffs(
            a_r[...], a_i[...], a_rr[...], a_ii[...], a_ri[...],
            inv_count=inv_count, epsilon=epsilon, group=group)
        mur_ref[...] = mu_r
        mui_ref[...] = mu_i
        p_ref[...] = p
        q_ref[...] = q
        s_ref[...] = s


def _apply_kernel(xr_ref, xi_ref, mur_ref, mui_ref, p_ref, q_ref, s_ref,
                  or_ref, oi_ref):
    """Pass B of the two-pass path: pure per-element apply (4 FMAs)."""
    xr_c = xr_ref[...] - mur_ref[...]
    xi_c = xi_ref[...] - mui_ref[...]
    p = p_ref[...]
    q = q_ref[...]
    s = s_ref[...]
    or_ref[...] = xr_c * p + xi_c * q
    oi_ref[...] = xr_c * q + xi_c * s


# --------------------------------------------------------------------------
# Wrapper helpers
# --------------------------------------------------------------------------
def _vmem_settings():
    """Chip-generation-aware VMEM budget / Mosaic limit."""
    try:
        cap = int(pltpu.get_tpu_info().vmem_capacity_bytes)
    except Exception:
        cap = 64 * _MIB                   # conservative (v7x-sized) fallback
    limit = min((cap * 3) // 4, 100 * _MIB)   # ~96 MiB v5e/v6e, ~48 MiB v7x
    return limit, limit                   # (budget, vmem_limit_bytes)


def _choose_group(spatial, channels, max_lanes=1024):
    """Largest power-of-two G with G | spatial, G*C <= max_lanes, rows >= 8."""
    g = 1
    while (spatial % (2 * g) == 0 and 2 * g * channels <= max_lanes
           and spatial // (2 * g) >= 8):
        g *= 2
    return g


def _choose_channel_pad(channels, group, max_blowup=2.0):
    """Pad C so L = G*C is a multiple of 128 whenever that is cheap."""
    if (group * channels) % 128 == 0:
        return channels
    t = 128 // math.gcd(group, 128)
    c_pad = ((channels + t - 1) // t) * t
    return c_pad if c_pad <= max_blowup * channels else channels


def _choose_lane_tile(lanes):
    if lanes <= 1024:
        return lanes
    for lt in (1024, 512, 256, 128):      # only reached when group == 1
        if lanes % lt == 0:
            return lt
    return lanes


# --------------------------------------------------------------------------
# Main entry points
# --------------------------------------------------------------------------
def complex_normalization_ri(xr, xi, *, epsilon=1e-5,
                             vmem_budget_bytes=None, vmem_limit_bytes=None):
    """Whitening on separate float32 real/imag planes [B, *spatial, C].

    Preferred entry point (no complex<->float conversion passes).  Returns
    (out_re, out_im) float32 arrays with the input shape.
    """
    default_budget, default_limit = _vmem_settings()
    if vmem_budget_bytes is None:
        vmem_budget_bytes = default_budget
    if vmem_limit_bytes is None:
        vmem_limit_bytes = default_limit

    orig_shape = xr.shape
    B, C = orig_shape[0], orig_shape[-1]
    S = 1
    for d in orig_shape[1:-1]:
        S *= d

    xr = xr.astype(jnp.float32).reshape(B, S, C)
    xi = xi.astype(jnp.float32).reshape(B, S, C)

    G = _choose_group(S, C)
    C_pad = _choose_channel_pad(C, G)
    if C_pad != C:
        pad = ((0, 0), (0, 0), (0, C_pad - C))
        xr = jnp.pad(xr, pad)
        xi = jnp.pad(xi, pad)
    R = S // G
    L = G * C_pad
    xr = xr.reshape(B, R, L)
    xi = xi.reshape(B, R, L)

    LT = _choose_lane_tile(L)             # LT == L whenever G > 1
    n_lane = L // LT
    inv_count = 1.0 / float(S)

    # ~16 block-sized live arrays: 4 in/out arrays x double buffering +
    # in-kernel temporaries (products, centered planes).
    single_pass_bytes = 16 * R * LT * 4
    if single_pass_bytes <= vmem_budget_bytes:
        # ---- single pass (1R + 1W): whole spatial slab per (batch, lane-tile)
        out_r, out_i = pl.pallas_call(
            functools.partial(_whiten_kernel, epsilon=epsilon, group=G,
                              inv_count=inv_count),
            grid_spec=pltpu.PrefetchScalarGridSpec(
                num_scalar_prefetch=0,
                grid=(B, n_lane),
                in_specs=[pl.BlockSpec((None, R, LT), lambda b, l: (b, 0, l)),
                          pl.BlockSpec((None, R, LT), lambda b, l: (b, 0, l))],
                out_specs=(pl.BlockSpec((None, R, LT), lambda b, l: (b, 0, l)),
                           pl.BlockSpec((None, R, LT), lambda b, l: (b, 0, l))),
            ),
            out_shape=(jax.ShapeDtypeStruct((B, R, L), jnp.float32),
                       jax.ShapeDtypeStruct((B, R, L), jnp.float32)),
            compiler_params=pltpu.CompilerParams(
                dimension_semantics=("parallel", "parallel"),
                vmem_limit_bytes=vmem_limit_bytes,
            ),
        )(xr, xi)
    else:
        # ---- scalable two-pass path: tile the spatial (row) axis ----
        bytes_per_row = LT * 4
        rt_budget = max(1, vmem_budget_bytes // (12 * bytes_per_row))
        rt_target = (4 * _MIB) // bytes_per_row          # ~4 MiB row tiles
        RT = max(8, (min(rt_budget, rt_target) // 8) * 8)
        RT = min(RT, max(8, (R // 8) * 8))
        n_s = pl.cdiv(R, RT)

        row_spec = pl.BlockSpec((None, RT, LT), lambda b, l, s: (b, s, l))
        coef_spec = pl.BlockSpec((None, 1, LT), lambda b, l, s: (b, 0, l))
        coef_shape = jax.ShapeDtypeStruct((B, 1, L), jnp.float32)

        # Pass A: raw moments -> whitening coefficients per (batch, lane-tile).
        coefs = pl.pallas_call(
            functools.partial(_moments_kernel, epsilon=epsilon, group=G,
                              inv_count=inv_count, rows_total=R,
                              rows_per_block=RT),
            grid_spec=pltpu.PrefetchScalarGridSpec(
                num_scalar_prefetch=0,
                grid=(B, n_lane, n_s),
                in_specs=[row_spec, row_spec],
                out_specs=(coef_spec,) * 5,
                scratch_shapes=[pltpu.VMEM((1, LT), jnp.float32)] * 5,
            ),
            out_shape=(coef_shape,) * 5,
            compiler_params=pltpu.CompilerParams(
                dimension_semantics=("parallel", "parallel", "arbitrary"),
                vmem_limit_bytes=vmem_limit_bytes,
            ),
        )(xr, xi)

        # Pass B: pure FMA apply at the HBM roofline.
        out_r, out_i = pl.pallas_call(
            _apply_kernel,
            grid_spec=pltpu.PrefetchScalarGridSpec(
                num_scalar_prefetch=0,
                grid=(B, n_lane, n_s),
                in_specs=[row_spec, row_spec] + [coef_spec] * 5,
                out_specs=(row_spec, row_spec),
            ),
            out_shape=(jax.ShapeDtypeStruct((B, R, L), jnp.float32),
                       jax.ShapeDtypeStruct((B, R, L), jnp.float32)),
            compiler_params=pltpu.CompilerParams(
                dimension_semantics=("parallel", "parallel", "parallel"),
                vmem_limit_bytes=vmem_limit_bytes,
            ),
        )(xr, xi, *coefs)

    out_r = out_r.reshape(B, S, C_pad)
    out_i = out_i.reshape(B, S, C_pad)
    if C_pad != C:
        out_r = out_r[..., :C]
        out_i = out_i[..., :C]
    return out_r.reshape(orig_shape), out_i.reshape(orig_shape)


def complex_normalization(x, *, epsilon=1e-5,
                          vmem_budget_bytes=None, vmem_limit_bytes=None):
    """ComplexNormalizationBase.forward: complex in / complex out (channel_last).

    TODO(synk): lax.bitcast_convert_type rejects complex dtypes, so the
    real/imag split here and the lax.complex repack below each cost one HBM
    pass; use complex_normalization_ri when the caller can hold separate
    re/im float32 planes.
    """
    x = x.astype(jnp.complex64)
    out_r, out_i = complex_normalization_ri(
        jnp.real(x), jnp.imag(x), epsilon=epsilon,
        vmem_budget_bytes=vmem_budget_bytes, vmem_limit_bytes=vmem_limit_bytes)
    return jax.lax.complex(out_r, out_i)


# --------------------------------------------------------------------------
# Pure-JAX reference (matches the PyTorch semantics: reduce over spatial dims).
# --------------------------------------------------------------------------
def _reference(x, epsilon=1e-5):
    axes = tuple(range(1, x.ndim - 1))
    mu = jnp.mean(x, axis=axes, keepdims=True)
    xc = x - mu
    xre = jnp.real(xc)
    xim = jnp.imag(xc)
    cov_uu = jnp.mean(xre * xre, axis=axes, keepdims=True) + epsilon
    cov_vv = jnp.mean(xim * xim, axis=axes, keepdims=True) + epsilon
    cov_uv = jnp.mean(xre * xim, axis=axes, keepdims=True)
    sqrdet = jnp.sqrt(cov_uu * cov_vv - cov_uv * cov_uv)
    denom = sqrdet * jnp.sqrt(cov_uu + 2.0 * sqrdet + cov_vv)
    re = (xre * (cov_vv + sqrdet) - xim * cov_uv) / denom
    im = (-xre * cov_uv + xim * (cov_uu + sqrdet)) / denom
    return jax.lax.complex(re.astype(jnp.float32), im.astype(jnp.float32))


if __name__ == "__main__":
    key = jax.random.PRNGKey(0)
    k1, k2, k3, k4 = jax.random.split(key, 4)

    # Test 1: module-default small shape, single-pass path (whole spatial slab).
    B, H, W, C = 2, 16, 16, 4
    x1 = jax.lax.complex(jax.random.normal(k1, (B, H, W, C), jnp.float32),
                         jax.random.normal(k2, (B, H, W, C), jnp.float32))
    out1 = jax.block_until_ready(jax.jit(complex_normalization)(x1))
    ref1 = _reference(x1)
    assert out1.shape == x1.shape and out1.dtype == jnp.complex64
    assert jnp.allclose(jnp.real(out1), jnp.real(ref1), atol=2e-4, rtol=2e-4)
    assert jnp.allclose(jnp.imag(out1), jnp.imag(ref1), atol=2e-4, rtol=2e-4)

    # Test 2: force the scalable two-pass path (coefficients from the moments
    # pass, ragged final row tile) by shrinking the VMEM budget.
    B2, H2, W2, C2 = 2, 24, 24, 4
    x2 = jax.lax.complex(jax.random.normal(k3, (B2, H2, W2, C2), jnp.float32),
                         jax.random.normal(k4, (B2, H2, W2, C2), jnp.float32))
    out2 = jax.block_until_ready(
        complex_normalization(x2, vmem_budget_bytes=64 * 1024))
    ref2 = _reference(x2)
    assert out2.shape == x2.shape and out2.dtype == jnp.complex64
    assert jnp.allclose(jnp.real(out2), jnp.real(ref2), atol=2e-4, rtol=2e-4)
    assert jnp.allclose(jnp.imag(out2), jnp.imag(ref2), atol=2e-4, rtol=2e-4)

    print("KERNEL_OK")
</pallas_src>

<mosaic_0001>
module attributes {stable_mosaic.version = 11 : i64} {
  func.func @_whiten_kernel(%arg0: i32, %arg1: i32, %arg2: memref<1x8x128xf32, #tpu.memory_space<vmem>>, %arg3: memref<1x8x128xf32, #tpu.memory_space<vmem>>, %arg4: memref<1x8x128xf32, #tpu.memory_space<vmem>>, %arg5: memref<1x8x128xf32, #tpu.memory_space<vmem>>) attributes {dimension_semantics = [#tpu.dimension_semantics<parallel>, #tpu.dimension_semantics<parallel>], iteration_bounds = array<i64: 2, 1>, scalar_prefetch = 0 : i64, scratch_operands = 0 : i64, tpu.core_type = #tpu.core_type<tc>, window_params = [{transform_indices = @transform_0, window_bounds = array<i64: 1, 8, 128>}, {transform_indices = @transform_1, window_bounds = array<i64: 1, 8, 128>}, {transform_indices = @transform_2, window_bounds = array<i64: 1, 8, 128>}, {transform_indices = @transform_3, window_bounds = array<i64: 1, 8, 128>}]} {
    %c0 = arith.constant 0 : index
    %c0_0 = arith.constant 0 : index
    %c0_1 = arith.constant 0 : index
    %0 = vector.load %arg2[%c0, %c0_0, %c0_1] : memref<1x8x128xf32, #tpu.memory_space<vmem>>, vector<1x8x128xf32>
    %1 = vector.shape_cast %0 : vector<1x8x128xf32> to vector<8x128xf32>
    %c0_2 = arith.constant 0 : index
    %c0_3 = arith.constant 0 : index
    %c0_4 = arith.constant 0 : index
    %2 = vector.load %arg3[%c0_2, %c0_3, %c0_4] : memref<1x8x128xf32, #tpu.memory_space<vmem>>, vector<1x8x128xf32>
    %3 = vector.shape_cast %2 : vector<1x8x128xf32> to vector<8x128xf32>
    %cst = arith.constant dense<0.000000e+00> : vector<128xf32>
    %4 = vector.multi_reduction <add>, %1, %cst [0] : vector<8x128xf32> to vector<128xf32>
    %5 = vector.shape_cast %4 : vector<128xf32> to vector<1x128xf32>
    %cst_5 = arith.constant dense<0.000000e+00> : vector<128xf32>
    %6 = vector.multi_reduction <add>, %3, %cst_5 [0] : vector<8x128xf32> to vector<128xf32>
    %7 = vector.shape_cast %6 : vector<128xf32> to vector<1x128xf32>
    %8 = arith.mulf %1, %1 : vector<8x128xf32>
    %cst_6 = arith.constant dense<0.000000e+00> : vector<128xf32>
    %9 = vector.multi_reduction <add>, %8, %cst_6 [0] : vector<8x128xf32> to vector<128xf32>
    %10 = vector.shape_cast %9 : vector<128xf32> to vector<1x128xf32>
    %11 = arith.mulf %3, %3 : vector<8x128xf32>
    %cst_7 = arith.constant dense<0.000000e+00> : vector<128xf32>
    %12 = vector.multi_reduction <add>, %11, %cst_7 [0] : vector<8x128xf32> to vector<128xf32>
    %13 = vector.shape_cast %12 : vector<128xf32> to vector<1x128xf32>
    %14 = arith.mulf %1, %3 : vector<8x128xf32>
    %cst_8 = arith.constant dense<0.000000e+00> : vector<128xf32>
    %15 = vector.multi_reduction <add>, %14, %cst_8 [0] : vector<8x128xf32> to vector<128xf32>
    %16 = vector.shape_cast %15 : vector<128xf32> to vector<1x128xf32>
    %c4_i32 = arith.constant 4 : i32
    %17 = tpu.dynamic_rotate %5 by %c4_i32 dim 1 : vector<1x128xf32>, i32 -> vector<1x128xf32>
    %18 = arith.addf %5, %17 : vector<1x128xf32>
    %c8_i32 = arith.constant 8 : i32
    %19 = tpu.dynamic_rotate %18 by %c8_i32 dim 1 : vector<1x128xf32>, i32 -> vector<1x128xf32>
    %20 = arith.addf %18, %19 : vector<1x128xf32>
    %c16_i32 = arith.constant 16 : i32
    %21 = tpu.dynamic_rotate %20 by %c16_i32 dim 1 : vector<1x128xf32>, i32 -> vector<1x128xf32>
    %22 = arith.addf %20, %21 : vector<1x128xf32>
    %c32_i32 = arith.constant 32 : i32
    %23 = tpu.dynamic_rotate %22 by %c32_i32 dim 1 : vector<1x128xf32>, i32 -> vector<1x128xf32>
    %24 = arith.addf %22, %23 : vector<1x128xf32>
    %c64_i32 = arith.constant 64 : i32
    %25 = tpu.dynamic_rotate %24 by %c64_i32 dim 1 : vector<1x128xf32>, i32 -> vector<1x128xf32>
    %26 = arith.addf %24, %25 : vector<1x128xf32>
    %c4_i32_9 = arith.constant 4 : i32
    %27 = tpu.dynamic_rotate %7 by %c4_i32_9 dim 1 : vector<1x128xf32>, i32 -> vector<1x128xf32>
    %28 = arith.addf %7, %27 : vector<1x128xf32>
    %c8_i32_10 = arith.constant 8 : i32
    %29 = tpu.dynamic_rotate %28 by %c8_i32_10 dim 1 : vector<1x128xf32>, i32 -> vector<1x128xf32>
    %30 = arith.addf %28, %29 : vector<1x128xf32>
    %c16_i32_11 = arith.constant 16 : i32
    %31 = tpu.dynamic_rotate %30 by %c16_i32_11 dim 1 : vector<1x128xf32>, i32 -> vector<1x128xf32>
    %32 = arith.addf %30, %31 : vector<1x128xf32>
    %c32_i32_12 = arith.constant 32 : i32
    %33 = tpu.dynamic_rotate %32 by %c32_i32_12 dim 1 : vector<1x128xf32>, i32 -> vector<1x128xf32>
    %34 = arith.addf %32, %33 : vector<1x128xf32>
    %c64_i32_13 = arith.constant 64 : i32
    %35 = tpu.dynamic_rotate %34 by %c64_i32_13 dim 1 : vector<1x128xf32>, i32 -> vector<1x128xf32>
    %36 = arith.addf %34, %35 : vector<1x128xf32>
    %c4_i32_14 = arith.constant 4 : i32
    %37 = tpu.dynamic_rotate %10 by %c4_i32_14 dim 1 : vector<1x128xf32>, i32 -> vector<1x128xf32>
    %38 = arith.addf %10, %37 : vector<1x128xf32>
    %c8_i32_15 = arith.constant 8 : i32
    %39 = tpu.dynamic_rotate %38 by %c8_i32_15 dim 1 : vector<1x128xf32>, i32 -> vector<1x128xf32>
    %40 = arith.addf %38, %39 : vector<1x128xf32>
    %c16_i32_16 = arith.constant 16 : i32
    %41 = tpu.dynamic_rotate %40 by %c16_i32_16 dim 1 : vector<1x128xf32>, i32 -> vector<1x128xf32>
    %42 = arith.addf %40, %41 : vector<1x128xf32>
    %c32_i32_17 = arith.constant 32 : i32
    %43 = tpu.dynamic_rotate %42 by %c32_i32_17 dim 1 : vector<1x128xf32>, i32 -> vector<1x128xf32>
    %44 = arith.addf %42, %43 : vector<1x128xf32>
    %c64_i32_18 = arith.constant 64 : i32
    %45 = tpu.dynamic_rotate %44 by %c64_i32_18 dim 1 : vector<1x128xf32>, i32 -> vector<1x128xf32>
    %46 = arith.addf %44, %45 : vector<1x128xf32>
    %c4_i32_19 = arith.constant 4 : i32
    %47 = tpu.dynamic_rotate %13 by %c4_i32_19 dim 1 : vector<1x128xf32>, i32 -> vector<1x128xf32>
    %48 = arith.addf %13, %47 : vector<1x128xf32>
    %c8_i32_20 = arith.constant 8 : i32
    %49 = tpu.dynamic_rotate %48 by %c8_i32_20 dim 1 : vector<1x128xf32>, i32 -> vector<1x128xf32>
    %50 = arith.addf %48, %49 : vector<1x128xf32>
    %c16_i32_21 = arith.constant 16 : i32
    %51 = tpu.dynamic_rotate %50 by %c16_i32_21 dim 1 : vector<1x128xf32>, i32 -> vector<1x128xf32>
    %52 = arith.addf %50, %51 : vector<1x128xf32>
    %c32_i32_22 = arith.constant 32 : i32
    %53 = tpu.dynamic_rotate %52 by %c32_i32_22 dim 1 : vector<1x128xf32>, i32 -> vector<1x128xf32>
    %54 = arith.addf %52, %53 : vector<1x128xf32>
    %c64_i32_23 = arith.constant 64 : i32
    %55 = tpu.dynamic_rotate %54 by %c64_i32_23 dim 1 : vector<1x128xf32>, i32 -> vector<1x128xf32>
    %56 = arith.addf %54, %55 : vector<1x128xf32>
    %c4_i32_24 = arith.constant 4 : i32
    %57 = tpu.dynamic_rotate %16 by %c4_i32_24 dim 1 : vector<1x128xf32>, i32 -> vector<1x128xf32>
    %58 = arith.addf %16, %57 : vector<1x128xf32>
    %c8_i32_25 = arith.constant 8 : i32
    %59 = tpu.dynamic_rotate %58 by %c8_i32_25 dim 1 : vector<1x128xf32>, i32 -> vector<1x128xf32>
    %60 = arith.addf %58, %59 : vector<1x128xf32>
    %c16_i32_26 = arith.constant 16 : i32
    %61 = tpu.dynamic_rotate %60 by %c16_i32_26 dim 1 : vector<1x128xf32>, i32 -> vector<1x128xf32>
    %62 = arith.addf %60, %61 : vector<1x128xf32>
    %c32_i32_27 = arith.constant 32 : i32
    %63 = tpu.dynamic_rotate %62 by %c32_i32_27 dim 1 : vector<1x128xf32>, i32 -> vector<1x128xf32>
    %64 = arith.addf %62, %63 : vector<1x128xf32>
    %c64_i32_28 = arith.constant 64 : i32
    %65 = tpu.dynamic_rotate %64 by %c64_i32_28 dim 1 : vector<1x128xf32>, i32 -> vector<1x128xf32>
    %66 = arith.addf %64, %65 : vector<1x128xf32>
    %cst_29 = arith.constant 3.906250e-03 : f32
    %67 = vector.broadcast %cst_29 : f32 to vector<1x128xf32>
    %68 = arith.mulf %26, %67 : vector<1x128xf32>
    %cst_30 = arith.constant 3.906250e-03 : f32
    %69 = vector.broadcast %cst_30 : f32 to vector<1x128xf32>
    %70 = arith.mulf %36, %69 : vector<1x128xf32>
    %cst_31 = arith.constant 3.906250e-03 : f32
    %71 = vector.broadcast %cst_31 : f32 to vector<1x128xf32>
    %72 = arith.mulf %46, %71 : vector<1x128xf32>
    %73 = arith.mulf %68, %68 : vector<1x128xf32>
    %74 = arith.subf %72, %73 : vector<1x128xf32>
    %cst_32 = arith.constant 0.000000e+00 : f32
    %75 = vector.broadcast %cst_32 : f32 to vector<1x128xf32>
    %76 = arith.maximumf %74, %75 : vector<1x128xf32>
    %cst_33 = arith.constant 9.99999974E-6 : f32
    %77 = vector.broadcast %cst_33 : f32 to vector<1x128xf32>
    %78 = arith.addf %76, %77 : vector<1x128xf32>
    %cst_34 = arith.constant 3.906250e-03 : f32
    %79 = vector.broadcast %cst_34 : f32 to vector<1x128xf32>
    %80 = arith.mulf %56, %79 : vector<1x128xf32>
    %81 = arith.mulf %70, %70 : vector<1x128xf32>
    %82 = arith.subf %80, %81 : vector<1x128xf32>
    %cst_35 = arith.constant 0.000000e+00 : f32
    %83 = vector.broadcast %cst_35 : f32 to vector<1x128xf32>
    %84 = arith.maximumf %82, %83 : vector<1x128xf32>
    %cst_36 = arith.constant 9.99999974E-6 : f32
    %85 = vector.broadcast %cst_36 : f32 to vector<1x128xf32>
    %86 = arith.addf %84, %85 : vector<1x128xf32>
    %cst_37 = arith.constant 3.906250e-03 : f32
    %87 = vector.broadcast %cst_37 : f32 to vector<1x128xf32>
    %88 = arith.mulf %66, %87 : vector<1x128xf32>
    %89 = arith.mulf %68, %70 : vector<1x128xf32>
    %90 = arith.subf %88, %89 : vector<1x128xf32>
    %91 = arith.mulf %78, %86 : vector<1x128xf32>
    %92 = arith.mulf %90, %90 : vector<1x128xf32>
    %93 = arith.subf %91, %92 : vector<1x128xf32>
    %cst_38 = arith.constant 9.99999991E-38 : f32
    %94 = vector.broadcast %cst_38 : f32 to vector<1x128xf32>
    %95 = arith.maximumf %93, %94 : vector<1x128xf32>
    %96 = math.rsqrt %95 : vector<1x128xf32>
    %97 = arith.mulf %95, %96 : vector<1x128xf32>
    %98 = arith.addf %78, %86 : vector<1x128xf32>
    %cst_39 = arith.constant 2.000000e+00 : f32
    %99 = vector.broadcast %cst_39 : f32 to vector<1x128xf32>
    %100 = arith.mulf %99, %97 : vector<1x128xf32>
    %101 = arith.addf %98, %100 : vector<1x128xf32>
    %102 = math.rsqrt %101 : vector<1x128xf32>
    %103 = arith.mulf %96, %102 : vector<1x128xf32>
    %104 = arith.addf %86, %97 : vector<1x128xf32>
    %105 = arith.mulf %104, %103 : vector<1x128xf32>
    %106 = arith.addf %78, %97 : vector<1x128xf32>
    %107 = arith.mulf %106, %103 : vector<1x128xf32>
    %cst_40 = arith.constant 0.000000e+00 : f32
    %108 = vector.broadcast %cst_40 : f32 to vector<1x128xf32>
    %109 = arith.subf %108, %90 : vector<1x128xf32>
    %110 = arith.mulf %109, %103 : vector<1x128xf32>
    %111 = vector.broadcast %68 : vector<1x128xf32> to vector<8x128xf32>
    %112 = arith.subf %1, %111 : vector<8x128xf32>
    %113 = vector.broadcast %70 : vector<1x128xf32> to vector<8x128xf32>
    %114 = arith.subf %3, %113 : vector<8x128xf32>
    %115 = vector.broadcast %105 : vector<1x128xf32> to vector<8x128xf32>
    %116 = arith.mulf %112, %115 : vector<8x128xf32>
    %117 = vector.broadcast %110 : vector<1x128xf32> to vector<8x128xf32>
    %118 = arith.mulf %114, %117 : vector<8x128xf32>
    %119 = arith.addf %116, %118 : vector<8x128xf32>
    %c0_41 = arith.constant 0 : index
    %c0_42 = arith.constant 0 : index
    %c0_43 = arith.constant 0 : index
    %120 = vector.load %arg4[%c0_41, %c0_42, %c0_43] : memref<1x8x128xf32, #tpu.memory_space<vmem>>, vector<1x8x128xf32>
    %121 = vector.shape_cast %120 : vector<1x8x128xf32> to vector<8x128xf32>
    %122 = vector.shape_cast %119 : vector<8x128xf32> to vector<1x8x128xf32>
    tpu.vector_store %arg4[%c0_41, %c0_42, %c0_43], %122 {strides = array<i32>} : memref<1x8x128xf32, #tpu.memory_space<vmem>>, vector<1x8x128xf32>,
    %123 = vector.broadcast %110 : vector<1x128xf32> to vector<8x128xf32>
    %124 = arith.mulf %112, %123 : vector<8x128xf32>
    %125 = vector.broadcast %107 : vector<1x128xf32> to vector<8x128xf32>
    %126 = arith.mulf %114, %125 : vector<8x128xf32>
    %127 = arith.addf %124, %126 : vector<8x128xf32>
    %c0_44 = arith.constant 0 : index
    %c0_45 = arith.constant 0 : index
    %c0_46 = arith.constant 0 : index
    %128 = vector.load %arg5[%c0_44, %c0_45, %c0_46] : memref<1x8x128xf32, #tpu.memory_space<vmem>>, vector<1x8x128xf32>
    %129 = vector.shape_cast %128 : vector<1x8x128xf32> to vector<8x128xf32>
    %130 = vector.shape_cast %127 : vector<8x128xf32> to vector<1x8x128xf32>
    tpu.vector_store %arg5[%c0_44, %c0_45, %c0_46], %130 {strides = array<i32>} : memref<1x8x128xf32, #tpu.memory_space<vmem>>, vector<1x8x128xf32>,
    return
  }
  func.func @transform_0(%arg0: i32, %arg1: i32) -> (i32, i32, i32) {
    %c0_i32 = arith.constant 0 : i32
    %c0_i32_0 = arith.constant 0 : i32
    return %arg0, %c0_i32, %arg1 : i32, i32, i32
  }
  func.func @transform_1(%arg0: i32, %arg1: i32) -> (i32, i32, i32) {
    %c0_i32 = arith.constant 0 : i32
    %c0_i32_0 = arith.constant 0 : i32
    return %arg0, %c0_i32, %arg1 : i32, i32, i32
  }
  func.func @transform_2(%arg0: i32, %arg1: i32) -> (i32, i32, i32) {
    %c0_i32 = arith.constant 0 : i32
    %c0_i32_0 = arith.constant 0 : i32
    return %arg0, %c0_i32, %arg1 : i32, i32, i32
  }
  func.func @transform_3(%arg0: i32, %arg1: i32) -> (i32, i32, i32) {
    %c0_i32 = arith.constant 0 : i32
    %c0_i32_0 = arith.constant 0 : i32
    return %arg0, %c0_i32, %arg1 : i32, i32, i32
  }
}

</mosaic_0001>

<llo_original>
// kernel: custom-call
$region0: #{custom-call}
  %s0 = inlined_call_operand.hbm [shape: c64[2,16,16,4], index: 0, kind: input, shape index: {}]
  %s1 = inlined_call_operand.vmem [shape: f32[2,16,16,4], index: 1, kind: output, shape index: {}]
  $region1: #{custom-call} parent=0
    #allocation0 [shape = 's32[1]{0}', space=sflag, size = 0x4, scoped, tag = 'scoped memory for custom-call']
    %2 = vsyncpa [#allocation0], 0
    %s3 = sshll.u32 %s1, 4
    %s4 = int_to_ptr.vmem [resolvable:$true] %s3
    %6 = dma.hbm_to_vmem [thread:$0]  %s0, 2048, %s4, [#allocation0]
    %7 = dma.done [#allocation0], 2048
    %8 = vsyncpa [#allocation0], 1

// kernel: custom-call.1
$region0: #{custom-call.1}
  %s0 = inlined_call_operand.hbm [shape: c64[2,16,16,4], index: 0, kind: input, shape index: {}]
  %s1 = inlined_call_operand.vmem [shape: f32[2,16,16,4], index: 1, kind: output, shape index: {}]
  %s2 = scalar_lea.hbm %s0, 2048
  $region1: #{custom-call.1} parent=0
    #allocation0 [shape = 's32[1]{0}', space=sflag, size = 0x4, scoped, tag = 'scoped memory for custom-call.1']
    %3 = vsyncpa [#allocation0], 0
    %s4 = sshll.u32 %s1, 4
    %s5 = int_to_ptr.vmem [resolvable:$true] %s4
    %7 = dma.hbm_to_vmem [thread:$0]  %s2, 2048, %s5, [#allocation0]
    %8 = dma.done [#allocation0], 2048
    %9 = vsyncpa [#allocation0], 1

// kernel: custom-call.2
$region0: #{custom-call.2}
  %s0 = inlined_call_operand.vmem [shape: f32[2,16,16,4], index: 0, kind: input, shape index: {}]
  %s1 = inlined_call_operand.vmem [shape: f32[2,16,16,4], index: 1, kind: input, shape index: {}]
  %s2 = inlined_call_operand.vmem [shape: c64[2,16,16,4], index: 2, kind: output, shape index: {}]
  %s4 = scalar_lea.vmem %s2, 512
  %v5 = vld [vmem:[%s0] sm:$0xff]
  %6 = vst [vmem:[%s2] sm:$0xff] %v5
  %s7 = scalar_lea.vmem %s2, 8
  %s8 = scalar_lea.vmem %s0, 8
  %v9 = vld [vmem:[%s8] sm:$0xff]
  %10 = vst [vmem:[%s7] sm:$0xff] %v9
  %s11 = scalar_lea.vmem %s2, 16
  %s12 = scalar_lea.vmem %s0, 16
  %v13 = vld [vmem:[%s12] sm:$0xff]
  %14 = vst [vmem:[%s11] sm:$0xff] %v13
  %s15 = scalar_lea.vmem %s2, 24
  %s16 = scalar_lea.vmem %s0, 24
  %v17 = vld [vmem:[%s16] sm:$0xff]
  %18 = vst [vmem:[%s15] sm:$0xff] %v17
  %s19 = scalar_lea.vmem %s2, 32
  %s20 = scalar_lea.vmem %s0, 32
  %v21 = vld [vmem:[%s20] sm:$0xff]
  %22 = vst [vmem:[%s19] sm:$0xff] %v21
  %s23 = scalar_lea.vmem %s2, 40
  %s24 = scalar_lea.vmem %s0, 40
  %v25 = vld [vmem:[%s24] sm:$0xff]
  %26 = vst [vmem:[%s23] sm:$0xff] %v25
  %s27 = scalar_lea.vmem %s2, 48
  %s28 = scalar_lea.vmem %s0, 48
  %v29 = vld [vmem:[%s28] sm:$0xff]
  %30 = vst [vmem:[%s27] sm:$0xff] %v29
  %s31 = scalar_lea.vmem %s2, 56
  %s32 = scalar_lea.vmem %s0, 56
  %v33 = vld [vmem:[%s32] sm:$0xff]
  %34 = vst [vmem:[%s31] sm:$0xff] %v33
  %s35 = scalar_lea.vmem %s2, 64
  %s36 = scalar_lea.vmem %s0, 64
  %v37 = vld [vmem:[%s36] sm:$0xff]
  %38 = vst [vmem:[%s35] sm:$0xff] %v37
  %s39 = scalar_lea.vmem %s2, 72
  %s40 = scalar_lea.vmem %s0, 72
  %v41 = vld [vmem:[%s40] sm:$0xff]
  %42 = vst [vmem:[%s39] sm:$0xff] %v41
  %s43 = scalar_lea.vmem %s2, 80
  %s44 = scalar_lea.vmem %s0, 80
  %v45 = vld [vmem:[%s44] sm:$0xff]
  %46 = vst [vmem:[%s43] sm:$0xff] %v45
  %s47 = scalar_lea.vmem %s2, 88
  %s48 = scalar_lea.vmem %s0, 88
  %v49 = vld [vmem:[%s48] sm:$0xff]
  %50 = vst [vmem:[%s47] sm:$0xff] %v49
  %s51 = scalar_lea.vmem %s2, 96
  %s52 = scalar_lea.vmem %s0, 96
  %v53 = vld [vmem:[%s52] sm:$0xff]
  %54 = vst [vmem:[%s51] sm:$0xff] %v53
  %s55 = scalar_lea.vmem %s2, 104
  %s56 = scalar_lea.vmem %s0, 104
  %v57 = vld [vmem:[%s56] sm:$0xff]
  %58 = vst [vmem:[%s55] sm:$0xff] %v57
  %s59 = scalar_lea.vmem %s2, 112
  %s60 = scalar_lea.vmem %s0, 112
  %v61 = vld [vmem:[%s60] sm:$0xff]
  %62 = vst [vmem:[%s59] sm:$0xff] %v61
  %s63 = scalar_lea.vmem %s2, 120
  %s64 = scalar_lea.vmem %s0, 120
  %v65 = vld [vmem:[%s64] sm:$0xff]
  %66 = vst [vmem:[%s63] sm:$0xff] %v65
  %s67 = scalar_lea.vmem %s2, 128
  %s68 = scalar_lea.vmem %s0, 128
  %v69 = vld [vmem:[%s68] sm:$0xff]
  %70 = vst [vmem:[%s67] sm:$0xff] %v69
  %s71 = scalar_lea.vmem %s2, 136
  %s72 = scalar_lea.vmem %s0, 136
  %v73 = vld [vmem:[%s72] sm:$0xff]
  %74 = vst [vmem:[%s71] sm:$0xff] %v73
  %s75 = scalar_lea.vmem %s2, 144
  %s76 = scalar_lea.vmem %s0, 144
  %v77 = vld [vmem:[%s76] sm:$0xff]
  %78 = vst [vmem:[%s75] sm:$0xff] %v77
  %s79 = scalar_lea.vmem %s2, 152
  %s80 = scalar_lea.vmem %s0, 152
  %v81 = vld [vmem:[%s80] sm:$0xff]
  %82 = vst [vmem:[%s79] sm:$0xff] %v81
  %s83 = scalar_lea.vmem %s2, 160
  %s84 = scalar_lea.vmem %s0, 160
  %v85 = vld [vmem:[%s84] sm:$0xff]
  %86 = vst [vmem:[%s83] sm:$0xff] %v85
  %s87 = scalar_lea.vmem %s2, 168
  %s88 = scalar_lea.vmem %s0, 168
  %v89 = vld [vmem:[%s88] sm:$0xff]
  %90 = vst [vmem:[%s87] sm:$0xff] %v89
  %s91 = scalar_lea.vmem %s2, 176
  %s92 = scalar_lea.vmem %s0, 176
  %v93 = vld [vmem:[%s92] sm:$0xff]
  %94 = vst [vmem:[%s91] sm:$0xff] %v93
  %s95 = scalar_lea.vmem %s2, 184
  %s96 = scalar_lea.vmem %s0, 184
  %v97 = vld [vmem:[%s96] sm:$0xff]
  %98 = vst [vmem:[%s95] sm:$0xff] %v97
  %s99 = scalar_lea.vmem %s2, 192
  %s100 = scalar_lea.vmem %s0, 192
  %v101 = vld [vmem:[%s100] sm:$0xff]
  %102 = vst [vmem:[%s99] sm:$0xff] %v101
  %s103 = scalar_lea.vmem %s2, 200
  %s104 = scalar_lea.vmem %s0, 200
  %v105 = vld [vmem:[%s104] sm:$0xff]
  %106 = vst [vmem:[%s103] sm:$0xff] %v105
  %s107 = scalar_lea.vmem %s2, 208
  %s108 = scalar_lea.vmem %s0, 208
  %v109 = vld [vmem:[%s108] sm:$0xff]
  %110 = vst [vmem:[%s107] sm:$0xff] %v109
  %s111 = scalar_lea.vmem %s2, 216
  %s112 = scalar_lea.vmem %s0, 216
  %v113 = vld [vmem:[%s112] sm:$0xff]
  %114 = vst [vmem:[%s111] sm:$0xff] %v113
  %s115 = scalar_lea.vmem %s2, 224
  %s116 = scalar_lea.vmem %s0, 224
  %v117 = vld [vmem:[%s116] sm:$0xff]
  %118 = vst [vmem:[%s115] sm:$0xff] %v117
  %s119 = scalar_lea.vmem %s2, 232
  %s120 = scalar_lea.vmem %s0, 232
  %v121 = vld [vmem:[%s120] sm:$0xff]
  %122 = vst [vmem:[%s119] sm:$0xff] %v121
  %s123 = scalar_lea.vmem %s2, 240
  %s124 = scalar_lea.vmem %s0, 240
  %v125 = vld [vmem:[%s124] sm:$0xff]
  %126 = vst [vmem:[%s123] sm:$0xff] %v125
  %s127 = scalar_lea.vmem %s2, 248
  %s128 = scalar_lea.vmem %s0, 248
  %v129 = vld [vmem:[%s128] sm:$0xff]
  %130 = vst [vmem:[%s127] sm:$0xff] %v129
  %s131 = scalar_lea.vmem %s2, 256
  %s132 = scalar_lea.vmem %s0, 256
  %v133 = vld [vmem:[%s132] sm:$0xff]
  %134 = vst [vmem:[%s131] sm:$0xff] %v133
  %s135 = scalar_lea.vmem %s2, 264
  %s136 = scalar_lea.vmem %s0, 264
  %v137 = vld [vmem:[%s136] sm:$0xff]
  %138 = vst [vmem:[%s135] sm:$0xff] %v137
  %s139 = scalar_lea.vmem %s2, 272
  %s140 = scalar_lea.vmem %s0, 272
  %v141 = vld [vmem:[%s140] sm:$0xff]
  %142 = vst [vmem:[%s139] sm:$0xff] %v141
  %s143 = scalar_lea.vmem %s2, 280
  %s144 = scalar_lea.vmem %s0, 280
  %v145 = vld [vmem:[%s144] sm:$0xff]
  %146 = vst [vmem:[%s143] sm:$0xff] %v145
  %s147 = scalar_lea.vmem %s2, 288
  %s148 = scalar_lea.vmem %s0, 288
  %v149 = vld [vmem:[%s148] sm:$0xff]
  %150 = vst [vmem:[%s147] sm:$0xff] %v149
  %s151 = scalar_lea.vmem %s2, 296
  %s152 = scalar_lea.vmem %s0, 296
  %v153 = vld [vmem:[%s152] sm:$0xff]
  %154 = vst [vmem:[%s151] sm:$0xff] %v153
  %s155 = scalar_lea.vmem %s2, 304
  %s156 = scalar_lea.vmem %s0, 304
  %v157 = vld [vmem:[%s156] sm:$0xff]
  %158 = vst [vmem:[%s155] sm:$0xff] %v157
  %s159 = scalar_lea.vmem %s2, 312
  %s160 = scalar_lea.vmem %s0, 312
  %v161 = vld [vmem:[%s160] sm:$0xff]
  %162 = vst [vmem:[%s159] sm:$0xff] %v161
  %s163 = scalar_lea.vmem %s2, 320
  %s164 = scalar_lea.vmem %s0, 320
  %v165 = vld [vmem:[%s164] sm:$0xff]
  %166 = vst [vmem:[%s163] sm:$0xff] %v165
  %s167 = scalar_lea.vmem %s2, 328
  %s168 = scalar_lea.vmem %s0, 328
  %v169 = vld [vmem:[%s168] sm:$0xff]
  %170 = vst [vmem:[%s167] sm:$0xff] %v169
  %s171 = scalar_lea.vmem %s2, 336
  %s172 = scalar_lea.vmem %s0, 336
  %v173 = vld [vmem:[%s172] sm:$0xff]
  %174 = vst [vmem:[%s171] sm:$0xff] %v173
  %s175 = scalar_lea.vmem %s2, 344
  %s176 = scalar_lea.vmem %s0, 344
  %v177 = vld [vmem:[%s176] sm:$0xff]
  %178 = vst [vmem:[%s175] sm:$0xff] %v177
  %s179 = scalar_lea.vmem %s2, 352
  %s180 = scalar_lea.vmem %s0, 352
  %v181 = vld [vmem:[%s180] sm:$0xff]
  %182 = vst [vmem:[%s179] sm:$0xff] %v181
  %s183 = scalar_lea.vmem %s2, 360
  %s184 = scalar_lea.vmem %s0, 360
  %v185 = vld [vmem:[%s184] sm:$0xff]
  %186 = vst [vmem:[%s183] sm:$0xff] %v185
  %s187 = scalar_lea.vmem %s2, 368
  %s188 = scalar_lea.vmem %s0, 368
  %v189 = vld [vmem:[%s188] sm:$0xff]
  %190 = vst [vmem:[%s187] sm:$0xff] %v189
  %s191 = scalar_lea.vmem %s2, 376
  %s192 = scalar_lea.vmem %s0, 376
  %v193 = vld [vmem:[%s192] sm:$0xff]
  %194 = vst [vmem:[%s191] sm:$0xff] %v193
  %s195 = scalar_lea.vmem %s2, 384
  %s196 = scalar_lea.vmem %s0, 384
  %v197 = vld [vmem:[%s196] sm:$0xff]
  %198 = vst [vmem:[%s195] sm:$0xff] %v197
  %s199 = scalar_lea.vmem %s2, 392
  %s200 = scalar_lea.vmem %s0, 392
  %v201 = vld [vmem:[%s200] sm:$0xff]
  %202 = vst [vmem:[%s199] sm:$0xff] %v201
  %s203 = scalar_lea.vmem %s2, 400
  %s204 = scalar_lea.vmem %s0, 400
  %v205 = vld [vmem:[%s204] sm:$0xff]
  %206 = vst [vmem:[%s203] sm:$0xff] %v205
  %s207 = scalar_lea.vmem %s2, 408
  %s208 = scalar_lea.vmem %s0, 408
  %v209 = vld [vmem:[%s208] sm:$0xff]
  %210 = vst [vmem:[%s207] sm:$0xff] %v209
  %s211 = scalar_lea.vmem %s2, 416
  %s212 = scalar_lea.vmem %s0, 416
  %v213 = vld [vmem:[%s212] sm:$0xff]
  %214 = vst [vmem:[%s211] sm:$0xff] %v213
  %s215 = scalar_lea.vmem %s2, 424
  %s216 = scalar_lea.vmem %s0, 424
  %v217 = vld [vmem:[%s216] sm:$0xff]
  %218 = vst [vmem:[%s215] sm:$0xff] %v217
  %s219 = scalar_lea.vmem %s2, 432
  %s220 = scalar_lea.vmem %s0, 432
  %v221 = vld [vmem:[%s220] sm:$0xff]
  %222 = vst [vmem:[%s219] sm:$0xff] %v221
  %s223 = scalar_lea.vmem %s2, 440
  %s224 = scalar_lea.vmem %s0, 440
  %v225 = vld [vmem:[%s224] sm:$0xff]
  %226 = vst [vmem:[%s223] sm:$0xff] %v225
  %s227 = scalar_lea.vmem %s2, 448
  %s228 = scalar_lea.vmem %s0, 448
  %v229 = vld [vmem:[%s228] sm:$0xff]
  %230 = vst [vmem:[%s227] sm:$0xff] %v229
  %s231 = scalar_lea.vmem %s2, 456
  %s232 = scalar_lea.vmem %s0, 456
  %v233 = vld [vmem:[%s232] sm:$0xff]
  %234 = vst [vmem:[%s231] sm:$0xff] %v233
  %s235 = scalar_lea.vmem %s2, 464
  %s236 = scalar_lea.vmem %s0, 464
  %v237 = vld [vmem:[%s236] sm:$0xff]
  %238 = vst [vmem:[%s235] sm:$0xff] %v237
  %s239 = scalar_lea.vmem %s2, 472
  %s240 = scalar_lea.vmem %s0, 472
  %v241 = vld [vmem:[%s240] sm:$0xff]
  %242 = vst [vmem:[%s239] sm:$0xff] %v241
  %s243 = scalar_lea.vmem %s2, 480
  %s244 = scalar_lea.vmem %s0, 480
  %v245 = vld [vmem:[%s244] sm:$0xff]
  %246 = vst [vmem:[%s243] sm:$0xff] %v245
  %s247 = scalar_lea.vmem %s2, 488
  %s248 = scalar_lea.vmem %s0, 488
  %v249 = vld [vmem:[%s248] sm:$0xff]
  %250 = vst [vmem:[%s247] sm:$0xff] %v249
  %s251 = scalar_lea.vmem %s2, 496
  %s252 = scalar_lea.vmem %s0, 496
  %v253 = vld [vmem:[%s252] sm:$0xff]
  %254 = vst [vmem:[%s251] sm:$0xff] %v253
  %s255 = scalar_lea.vmem %s2, 504
  %s256 = scalar_lea.vmem %s0, 504
  %v257 = vld [vmem:[%s256] sm:$0xff]
  %258 = vst [vmem:[%s255] sm:$0xff] %v257
  %v259 = vld [vmem:[%s1] sm:$0xff]
  %260 = vst [vmem:[%s4] sm:$0xff] %v259
  %s261 = scalar_lea.vmem %s4, 8
  %s262 = scalar_lea.vmem %s1, 8
  %v263 = vld [vmem:[%s262] sm:$0xff]
  %264 = vst [vmem:[%s261] sm:$0xff] %v263
  %s265 = scalar_lea.vmem %s4, 16
  %s266 = scalar_lea.vmem %s1, 16
  %v267 = vld [vmem:[%s266] sm:$0xff]
  %268 = vst [vmem:[%s265] sm:$0xff] %v267
  %s269 = scalar_lea.vmem %s4, 24
  %s270 = scalar_lea.vmem %s1, 24
  %v271 = vld [vmem:[%s270] sm:$0xff]
  %272 = vst [vmem:[%s269] sm:$0xff] %v271
  %s273 = scalar_lea.vmem %s4, 32
  %s274 = scalar_lea.vmem %s1, 32
  %v275 = vld [vmem:[%s274] sm:$0xff]
  %276 = vst [vmem:[%s273] sm:$0xff] %v275
  %s277 = scalar_lea.vmem %s4, 40
  %s278 = scalar_lea.vmem %s1, 40
  %v279 = vld [vmem:[%s278] sm:$0xff]
  %280 = vst [vmem:[%s277] sm:$0xff] %v279
  %s281 = scalar_lea.vmem %s4, 48
  %s282 = scalar_lea.vmem %s1, 48
  %v283 = vld [vmem:[%s282] sm:$0xff]
  %284 = vst [vmem:[%s281] sm:$0xff] %v283
  %s285 = scalar_lea.vmem %s4, 56
  %s286 = scalar_lea.vmem %s1, 56
  %v287 = vld [vmem:[%s286] sm:$0xff]
  %288 = vst [vmem:[%s285] sm:$0xff] %v287
  %s289 = scalar_lea.vmem %s4, 64
  %s290 = scalar_lea.vmem %s1, 64
  %v291 = vld [vmem:[%s290] sm:$0xff]
  %292 = vst [vmem:[%s289] sm:$0xff] %v291
  %s293 = scalar_lea.vmem %s4, 72
  %s294 = scalar_lea.vmem %s1, 72
  %v295 = vld [vmem:[%s294] sm:$0xff]
  %296 = vst [vmem:[%s293] sm:$0xff] %v295
  %s297 = scalar_lea.vmem %s4, 80
  %s298 = scalar_lea.vmem %s1, 80
  %v299 = vld [vmem:[%s298] sm:$0xff]
  %300 = vst [vmem:[%s297] sm:$0xff] %v299
  %s301 = scalar_lea.vmem %s4, 88
  %s302 = scalar_lea.vmem %s1, 88
  %v303 = vld [vmem:[%s302] sm:$0xff]
  %304 = vst [vmem:[%s301] sm:$0xff] %v303
  %s305 = scalar_lea.vmem %s4, 96
  %s306 = scalar_lea.vmem %s1, 96
  %v307 = vld [vmem:[%s306] sm:$0xff]
  %308 = vst [vmem:[%s305] sm:$0xff] %v307
  %s309 = scalar_lea.vmem %s4, 104
  %s310 = scalar_lea.vmem %s1, 104
  %v311 = vld [vmem:[%s310] sm:$0xff]
  %312 = vst [vmem:[%s309] sm:$0xff] %v311
  %s313 = scalar_lea.vmem %s4, 112
  %s314 = scalar_lea.vmem %s1, 112
  %v315 = vld [vmem:[%s314] sm:$0xff]
  %316 = vst [vmem:[%s313] sm:$0xff] %v315
  %s317 = scalar_lea.vmem %s4, 120
  %s318 = scalar_lea.vmem %s1, 120
  %v319 = vld [vmem:[%s318] sm:$0xff]
  %320 = vst [vmem:[%s317] sm:$0xff] %v319
  %s321 = scalar_lea.vmem %s4, 128
  %s322 = scalar_lea.vmem %s1, 128
  %v323 = vld [vmem:[%s322] sm:$0xff]
  %324 = vst [vmem:[%s321] sm:$0xff] %v323
  %s325 = scalar_lea.vmem %s4, 136
  %s326 = scalar_lea.vmem %s1, 136
  %v327 = vld [vmem:[%s326] sm:$0xff]
  %328 = vst [vmem:[%s325] sm:$0xff] %v327
  %s329 = scalar_lea.vmem %s4, 144
  %s330 = scalar_lea.vmem %s1, 144
  %v331 = vld [vmem:[%s330] sm:$0xff]
  %332 = vst [vmem:[%s329] sm:$0xff] %v331
  %s333 = scalar_lea.vmem %s4, 152
  %s334 = scalar_lea.vmem %s1, 152
  %v335 = vld [vmem:[%s334] sm:$0xff]
  %336 = vst [vmem:[%s333] sm:$0xff] %v335
  %s337 = scalar_lea.vmem %s4, 160
  %s338 = scalar_lea.vmem %s1, 160
  %v339 = vld [vmem:[%s338] sm:$0xff]
  %340 = vst [vmem:[%s337] sm:$0xff] %v339
  %s341 = scalar_lea.vmem %s4, 168
  %s342 = scalar_lea.vmem %s1, 168
  %v343 = vld [vmem:[%s342] sm:$0xff]
  %344 = vst [vmem:[%s341] sm:$0xff] %v343
  %s345 = scalar_lea.vmem %s4, 176
  %s346 = scalar_lea.vmem %s1, 176
  %v347 = vld [vmem:[%s346] sm:$0xff]
  %348 = vst [vmem:[%s345] sm:$0xff] %v347
  %s349 = scalar_lea.vmem %s4, 184
  %s350 = scalar_lea.vmem %s1, 184
  %v351 = vld [vmem:[%s350] sm:$0xff]
  %352 = vst [vmem:[%s349] sm:$0xff] %v351
  %s353 = scalar_lea.vmem %s4, 192
  %s354 = scalar_lea.vmem %s1, 192
  %v355 = vld [vmem:[%s354] sm:$0xff]
  %356 = vst [vmem:[%s353] sm:$0xff] %v355
  %s357 = scalar_lea.vmem %s4, 200
  %s358 = scalar_lea.vmem %s1, 200
  %v359 = vld [vmem:[%s358] sm:$0xff]
  %360 = vst [vmem:[%s357] sm:$0xff] %v359
  %s361 = scalar_lea.vmem %s4, 208
  %s362 = scalar_lea.vmem %s1, 208
  %v363 = vld [vmem:[%s362] sm:$0xff]
  %364 = vst [vmem:[%s361] sm:$0xff] %v363
  %s365 = scalar_lea.vmem %s4, 216
  %s366 = scalar_lea.vmem %s1, 216
  %v367 = vld [vmem:[%s366] sm:$0xff]
  %368 = vst [vmem:[%s365] sm:$0xff] %v367
  %s369 = scalar_lea.vmem %s4, 224
  %s370 = scalar_lea.vmem %s1, 224
  %v371 = vld [vmem:[%s370] sm:$0xff]
  %372 = vst [vmem:[%s369] sm:$0xff] %v371
  %s373 = scalar_lea.vmem %s4, 232
  %s374 = scalar_lea.vmem %s1, 232
  %v375 = vld [vmem:[%s374] sm:$0xff]
  %376 = vst [vmem:[%s373] sm:$0xff] %v375
  %s377 = scalar_lea.vmem %s4, 240
  %s378 = scalar_lea.vmem %s1, 240
  %v379 = vld [vmem:[%s378] sm:$0xff]
  %380 = vst [vmem:[%s377] sm:$0xff] %v379
  %s381 = scalar_lea.vmem %s4, 248
  %s382 = scalar_lea.vmem %s1, 248
  %v383 = vld [vmem:[%s382] sm:$0xff]
  %384 = vst [vmem:[%s381] sm:$0xff] %v383
  %s385 = scalar_lea.vmem %s4, 256
  %s386 = scalar_lea.vmem %s1, 256
  %v387 = vld [vmem:[%s386] sm:$0xff]
  %388 = vst [vmem:[%s385] sm:$0xff] %v387
  %s389 = scalar_lea.vmem %s4, 264
  %s390 = scalar_lea.vmem %s1, 264
  %v391 = vld [vmem:[%s390] sm:$0xff]
  %392 = vst [vmem:[%s389] sm:$0xff] %v391
  %s393 = scalar_lea.vmem %s4, 272
  %s394 = scalar_lea.vmem %s1, 272
  %v395 = vld [vmem:[%s394] sm:$0xff]
  %396 = vst [vmem:[%s393] sm:$0xff] %v395
  %s397 = scalar_lea.vmem %s4, 280
  %s398 = scalar_lea.vmem %s1, 280
  %v399 = vld [vmem:[%s398] sm:$0xff]
  %400 = vst [vmem:[%s397] sm:$0xff] %v399
  %s401 = scalar_lea.vmem %s4, 288
  %s402 = scalar_lea.vmem %s1, 288
  %v403 = vld [vmem:[%s402] sm:$0xff]
  %404 = vst [vmem:[%s401] sm:$0xff] %v403
  %s405 = scalar_lea.vmem %s4, 296
  %s406 = scalar_lea.vmem %s1, 296
  %v407 = vld [vmem:[%s406] sm:$0xff]
  %408 = vst [vmem:[%s405] sm:$0xff] %v407
  %s409 = scalar_lea.vmem %s4, 304
  %s410 = scalar_lea.vmem %s1, 304
  %v411 = vld [vmem:[%s410] sm:$0xff]
  %412 = vst [vmem:[%s409] sm:$0xff] %v411
  %s413 = scalar_lea.vmem %s4, 312
  %s414 = scalar_lea.vmem %s1, 312
  %v415 = vld [vmem:[%s414] sm:$0xff]
  %416 = vst [vmem:[%s413] sm:$0xff] %v415
  %s417 = scalar_lea.vmem %s4, 320
  %s418 = scalar_lea.vmem %s1, 320
  %v419 = vld [vmem:[%s418] sm:$0xff]
  %420 = vst [vmem:[%s417] sm:$0xff] %v419
  %s421 = scalar_lea.vmem %s4, 328
  %s422 = scalar_lea.vmem %s1, 328
  %v423 = vld [vmem:[%s422] sm:$0xff]
  %424 = vst [vmem:[%s421] sm:$0xff] %v423
  %s425 = scalar_lea.vmem %s4, 336
  %s426 = scalar_lea.vmem %s1, 336
  %v427 = vld [vmem:[%s426] sm:$0xff]
  %428 = vst [vmem:[%s425] sm:$0xff] %v427
  %s429 = scalar_lea.vmem %s4, 344
  %s430 = scalar_lea.vmem %s1, 344
  %v431 = vld [vmem:[%s430] sm:$0xff]
  %432 = vst [vmem:[%s429] sm:$0xff] %v431
  %s433 = scalar_lea.vmem %s4, 352
  %s434 = scalar_lea.vmem %s1, 352
  %v435 = vld [vmem:[%s434] sm:$0xff]
  %436 = vst [vmem:[%s433] sm:$0xff] %v435
  %s437 = scalar_lea.vmem %s4, 360
  %s438 = scalar_lea.vmem %s1, 360
  %v439 = vld [vmem:[%s438] sm:$0xff]
  %440 = vst [vmem:[%s437] sm:$0xff] %v439
  %s441 = scalar_lea.vmem %s4, 368
  %s442 = scalar_lea.vmem %s1, 368
  %v443 = vld [vmem:[%s442] sm:$0xff]
  %444 = vst [vmem:[%s441] sm:$0xff] %v443
  %s445 = scalar_lea.vmem %s4, 376
  %s446 = scalar_lea.vmem %s1, 376
  %v447 = vld [vmem:[%s446] sm:$0xff]
  %448 = vst [vmem:[%s445] sm:$0xff] %v447
  %s449 = scalar_lea.vmem %s4, 384
  %s450 = scalar_lea.vmem %s1, 384
  %v451 = vld [vmem:[%s450] sm:$0xff]
  %452 = vst [vmem:[%s449] sm:$0xff] %v451
  %s453 = scalar_lea.vmem %s4, 392
  %s454 = scalar_lea.vmem %s1, 392
  %v455 = vld [vmem:[%s454] sm:$0xff]
  %456 = vst [vmem:[%s453] sm:$0xff] %v455
  %s457 = scalar_lea.vmem %s4, 400
  %s458 = scalar_lea.vmem %s1, 400
  %v459 = vld [vmem:[%s458] sm:$0xff]
  %460 = vst [vmem:[%s457] sm:$0xff] %v459
  %s461 = scalar_lea.vmem %s4, 408
  %s462 = scalar_lea.vmem %s1, 408
  %v463 = vld [vmem:[%s462] sm:$0xff]
  %464 = vst [vmem:[%s461] sm:$0xff] %v463
  %s465 = scalar_lea.vmem %s4, 416
  %s466 = scalar_lea.vmem %s1, 416
  %v467 = vld [vmem:[%s466] sm:$0xff]
  %468 = vst [vmem:[%s465] sm:$0xff] %v467
  %s469 = scalar_lea.vmem %s4, 424
  %s470 = scalar_lea.vmem %s1, 424
  %v471 = vld [vmem:[%s470] sm:$0xff]
  %472 = vst [vmem:[%s469] sm:$0xff] %v471
  %s473 = scalar_lea.vmem %s4, 432
  %s474 = scalar_lea.vmem %s1, 432
  %v475 = vld [vmem:[%s474] sm:$0xff]
  %476 = vst [vmem:[%s473] sm:$0xff] %v475
  %s477 = scalar_lea.vmem %s4, 440
  %s478 = scalar_lea.vmem %s1, 440
  %v479 = vld [vmem:[%s478] sm:$0xff]
  %480 = vst [vmem:[%s477] sm:$0xff] %v479
  %s481 = scalar_lea.vmem %s4, 448
  %s482 = scalar_lea.vmem %s1, 448
  %v483 = vld [vmem:[%s482] sm:$0xff]
  %484 = vst [vmem:[%s481] sm:$0xff] %v483
  %s485 = scalar_lea.vmem %s4, 456
  %s486 = scalar_lea.vmem %s1, 456
  %v487 = vld [vmem:[%s486] sm:$0xff]
  %488 = vst [vmem:[%s485] sm:$0xff] %v487
  %s489 = scalar_lea.vmem %s4, 464
  %s490 = scalar_lea.vmem %s1, 464
  %v491 = vld [vmem:[%s490] sm:$0xff]
  %492 = vst [vmem:[%s489] sm:$0xff] %v491
  %s493 = scalar_lea.vmem %s4, 472
  %s494 = scalar_lea.vmem %s1, 472
  %v495 = vld [vmem:[%s494] sm:$0xff]
  %496 = vst [vmem:[%s493] sm:$0xff] %v495
  %s497 = scalar_lea.vmem %s4, 480
  %s498 = scalar_lea.vmem %s1, 480
  %v499 = vld [vmem:[%s498] sm:$0xff]
  %500 = vst [vmem:[%s497] sm:$0xff] %v499
  %s501 = scalar_lea.vmem %s4, 488
  %s502 = scalar_lea.vmem %s1, 488
  %v503 = vld [vmem:[%s502] sm:$0xff]
  %504 = vst [vmem:[%s501] sm:$0xff] %v503
  %s505 = scalar_lea.vmem %s4, 496
  %s506 = scalar_lea.vmem %s1, 496
  %v507 = vld [vmem:[%s506] sm:$0xff]
  %508 = vst [vmem:[%s505] sm:$0xff] %v507
  %s509 = scalar_lea.vmem %s4, 504
  %s510 = scalar_lea.vmem %s1, 504
  %v511 = vld [vmem:[%s510] sm:$0xff]
  %512 = vst [vmem:[%s509] sm:$0xff] %v511

// kernel: complex_normalization.1
$region0: #{complex_normalization.1}
  #allocation0 [shape = 'u32[]', space=smem, size = 0x4, offset = 0x4, fixed_abs, tag = 'smem constant byte address 0x4 - core index']
  #allocation1 [shape = 'u32[144,128]{1,0:T(1,128)}', space=vmem, size = 0x12000, scoped, tag = 'internal scratch']
  %s0 = inlined_call_operand.vmem [shape: f32[2,8,128], index: 0, kind: input, shape index: {}]
  %s1 = inlined_call_operand.vmem [shape: f32[2,8,128], index: 1, kind: input, shape index: {}]
  %s2 = inlined_call_operand.vmem [shape: f32[2,8,128], index: 2, kind: output, shape index: {0}]
  %s3 = inlined_call_operand.vmem [shape: f32[2,8,128], index: 3, kind: output, shape index: {1}]
  %4 = xla_tuple %s2, %s3
  %s5 = sld [smem:[#allocation0]]
  $region49: #{complex_normalization.1} parent=0
    _
  %s7 = ssub.s32 1, %s5
  %s8 = scalar_select 0, %s7, %s5
  loop: start=0, step=1, limit=4
  $region2: #{complex_normalization.1} parent=0 // loop_pre_header
    _
  $region3: #{complex_normalization.1} parent=0 // loop_header
    %s10 = sphi 0, %s14
    %p11 = scmp.ge.s32.totalorder %s10, 4
    %s17 = sphi 0, %s29
    %s18 = sphi 0, %s25
    %s19 = sphi 0, %s17
    %s20 = sphi 0, %s18
    %s21 = sphi 0, %s19
    %s22 = sphi 0, %s20
    %s34 = sphi 0, %s36
    %s37 = sphi 0, %s34
    %s38 = sphi 0, %s37
    %s54 = sphi 0, %s38
    %s62 = sphi 0, %s64
    %s65 = sphi 0, %s62
    %s66 = sphi 0, %s65
    %s82 = sphi 0, %s66
    %s90 = sphi 0, %s92
    %s93 = sphi 0, %s90
    %s94 = sphi 0, %s93
    %s110 = sphi 0, %s94
    %s118 = sphi 0, %s120
    %s121 = sphi 0, %s118
    %s122 = sphi 0, %s121
    %s138 = sphi 0, %s122
  $region4: #{complex_normalization.1} parent=0 // loop_header_branch
    %13 = sbr.rel (%p11) target = $region8
  $region5: #{complex_normalization.1} parent=0 // loop_body
    %s15 = ssub.s32 %s10, 1
    %s16 = ssub.s32 %s10, 2
    %s23 = sadd.s32 1, %s18
    %p24 = scmp.ge.s32.totalorder %s23, 1
    %s25 = scalar_select %p24, 0, %s23
    %s26 = sadd.s32 1, %s17
    %s27 = scalar_select %p24, %s26, %s17
    %p28 = scmp.ge.s32.totalorder %s27, 2
    %s29 = scalar_select %p28, 0, %s27
    %s30 = ssub.s32 %s17, %s29
    %s31 = ssub.s32 %s18, %s25
    %s32 = sor.u32 %s30, %s31
    %p33 = scmp.eq.s32.totalorder %s32, 0
    %s35 = sadd.s32 %s34, 1
    %s36 = scalar_select %p33, %s34, %s35
    %p39 = pneg %p33
    %p40 = scmp.eq.s32.totalorder %s10, 1
    %p41 = por %p39, %p40
    %p42 = scmp.ne.s32.totalorder %s34, %s37
    %p43 = scmp.eq.s32.totalorder %s10, 0
    %p44 = por %p42, %p43
    %p45 = scmp.ne.s32.totalorder %s34, %s37
    %p46 = scmp.eq.s32.totalorder %s15, 1
    %p47 = por %p45, %p46
    %p48 = scmp.ne.s32.totalorder %s37, %s38
    %p49 = scmp.eq.s32.totalorder %s15, 0
    %p50 = por %p48, %p49
    %p51 = scmp.ne.s32.totalorder %s37, %s38
    %p52 = scmp.eq.s32.totalorder %s16, 1
    %p53 = por %p51, %p52
    %p55 = scmp.ne.s32.totalorder %s38, %s54
    %p56 = scmp.eq.s32.totalorder %s16, 0
    %p57 = por %p55, %p56
    %s58 = ssub.s32 %s17, %s29
    %s59 = ssub.s32 %s18, %s25
    %s60 = sor.u32 %s58, %s59
    %p61 = scmp.eq.s32.totalorder %s60, 0
    %s63 = sadd.s32 %s62, 1
    %s64 = scalar_select %p61, %s62, %s63
    %p67 = pneg %p61
    %p68 = scmp.eq.s32.totalorder %s10, 1
    %p69 = por %p67, %p68
    %p70 = scmp.ne.s32.totalorder %s62, %s65
    %p71 = scmp.eq.s32.totalorder %s10, 0
    %p72 = por %p70, %p71
    %p73 = scmp.ne.s32.totalorder %s62, %s65
    %p74 = scmp.eq.s32.totalorder %s15, 1
    %p75 = por %p73, %p74
    %p76 = scmp.ne.s32.totalorder %s65, %s66
    %p77 = scmp.eq.s32.totalorder %s15, 0
    %p78 = por %p76, %p77
    %p79 = scmp.ne.s32.totalorder %s65, %s66
    %p80 = scmp.eq.s32.totalorder %s16, 1
    %p81 = por %p79, %p80
    %p83 = scmp.ne.s32.totalorder %s66, %s82
    %p84 = scmp.eq.s32.totalorder %s16, 0
    %p85 = por %p83, %p84
    %s86 = ssub.s32 %s17, %s29
    %s87 = ssub.s32 %s18, %s25
    %s88 = sor.u32 %s86, %s87
    %p89 = scmp.eq.s32.totalorder %s88, 0
    %s91 = sadd.s32 %s90, 1
    %s92 = scalar_select %p89, %s90, %s91
    %p95 = pneg %p89
    %p96 = scmp.eq.s32.totalorder %s10, 1
    %p97 = por %p95, %p96
    %p98 = scmp.ne.s32.totalorder %s90, %s93
    %p99 = scmp.eq.s32.totalorder %s10, 0
    %p100 = por %p98, %p99
    %p101 = scmp.ne.s32.totalorder %s90, %s93
    %p102 = scmp.eq.s32.totalorder %s15, 1
    %p103 = por %p101, %p102
    %p104 = scmp.ne.s32.totalorder %s93, %s94
    %p105 = scmp.eq.s32.totalorder %s15, 0
    %p106 = por %p104, %p105
    %p107 = scmp.ne.s32.totalorder %s93, %s94
    %p108 = scmp.eq.s32.totalorder %s16, 1
    %p109 = por %p107, %p108
    %p111 = scmp.ne.s32.totalorder %s94, %s110
    %p112 = scmp.eq.s32.totalorder %s16, 0
    %p113 = por %p111, %p112
    %s114 = ssub.s32 %s17, %s29
    %s115 = ssub.s32 %s18, %s25
    %s116 = sor.u32 %s114, %s115
    %p117 = scmp.eq.s32.totalorder %s116, 0
    %s119 = sadd.s32 %s118, 1
    %s120 = scalar_select %p117, %s118, %s119
    %p123 = pneg %p117
    %p124 = scmp.eq.s32.totalorder %s10, 1
    %p125 = por %p123, %p124
    %p126 = scmp.ne.s32.totalorder %s118, %s121
    %p127 = scmp.eq.s32.totalorder %s10, 0
    %p128 = por %p126, %p127
    %p129 = scmp.ne.s32.totalorder %s118, %s121
    %p130 = scmp.eq.s32.totalorder %s15, 1
    %p131 = por %p129, %p130
    %p132 = scmp.ne.s32.totalorder %s121, %s122
    %p133 = scmp.eq.s32.totalorder %s15, 0
    %p134 = por %p132, %p133
    %p135 = scmp.ne.s32.totalorder %s121, %s122
    %p136 = scmp.eq.s32.totalorder %s16, 1
    %p137 = por %p135, %p136
    %p139 = scmp.ne.s32.totalorder %s122, %s138
    %p140 = scmp.eq.s32.totalorder %s16, 0
    %p141 = por %p139, %p140
    %p142 = scmp.le.s32.totalorder 1, %s10
    %p143 = scmp.lt.s32.totalorder %s10, 3
    %p144 = pnand %p142, %p143
    %p145 = pneg %p144
    // Predicated region
    $region9: #{complex_normalization.1} parent=5 // pred_check
      _
    $region10: #{complex_normalization.1} parent=5 // pred_check_branch
      %147 = sbr.rel (%p144) target = $region12
    $region11: #{complex_normalization.1} parent=5 // pred_region
      %s148 = ssub.s32 %s10, 1
    $region12: #{complex_normalization.1} parent=5 // pred_fallthru
      _
    %p149 = scmp.lt.s32.totalorder %s10, 2
    // Predicated region
    $region13: #{complex_normalization.1} parent=5 // pred_check
      %p150 = pneg %p149
    $region14: #{complex_normalization.1} parent=5 // pred_check_branch
      %152 = sbr.rel (%p150) target = $region16
    $region15: #{complex_normalization.1} parent=5 // pred_region
      // Predicated region
      $region17: #{complex_normalization.1} parent=15 // pred_check
        %p153 = pneg %p44
      $region18: #{complex_normalization.1} parent=15 // pred_check_branch
        %155 = sbr.rel (%p153) target = $region20
      $region19: #{complex_normalization.1} parent=15 // pred_region
        %p156 = scmp.lt.s32.totalorder %s17, 1
        %s157 = scalar_select %p156, %s17, 1
        %p158 = scmp.lt.s32.totalorder %s18, 0
        %s159 = scalar_select %p158, %s18, 0
        %s160 = sadd.s32 %s159, %s157
        %s161 = smul.addr %s160, 8
        %s162 = scalar_lea.vmem %s0, %s161
      $region20: #{complex_normalization.1} parent=15 // pred_fallthru
        _
      // Predicated region
      $region21: #{complex_normalization.1} parent=15 // pred_check
        %p163 = pneg %p72
      $region22: #{complex_normalization.1} parent=15 // pred_check_branch
        %165 = sbr.rel (%p163) target = $region24
      $region23: #{complex_normalization.1} parent=15 // pred_region
        %p166 = scmp.lt.s32.totalorder %s17, 1
        %s167 = scalar_select %p166, %s17, 1
        %p168 = scmp.lt.s32.totalorder %s18, 0
        %s169 = scalar_select %p168, %s18, 0
        %s170 = sadd.s32 %s169, %s167
        %s171 = smul.addr %s170, 8
        %s172 = scalar_lea.vmem %s1, %s171
      $region24: #{complex_normalization.1} parent=15 // pred_fallthru
        _
    $region16: #{complex_normalization.1} parent=5 // pred_fallthru
      _
    %p173 = scmp.le.s32.totalorder 1, %s10
    %p174 = scmp.lt.s32.totalorder %s10, 3
    %p175 = pnand %p173, %p174
    %p176 = pneg %p175
    // Predicated region
    $region25: #{complex_normalization.1} parent=5 // pred_check
      _
    $region26: #{complex_normalization.1} parent=5 // pred_check_branch
      %178 = sbr.rel (%p175) target = $region28
    $region27: #{complex_normalization.1} parent=5 // pred_region
      %s179 = ssub.s32 %s10, 1
      %p180 = scmp.lt.s32.totalorder %s19, 1
      %s181 = scalar_select %p180, %s19, 1
      %p182 = scmp.lt.s32.totalorder %s20, 0
      %s183 = scalar_select %p182, %s20, 0
      %s184 = sadd.s32 %s183, %s181
      %s185 = smul.addr %s184, 8
      %s186 = scalar_lea.vmem %s0, %s185
      %p187 = pneg %p50
      %p188 = pneg %p47
      %p189 = scmp.lt.s32.totalorder %s19, 1
      %s190 = scalar_select %p189, %s19, 1
      %p191 = scmp.lt.s32.totalorder %s20, 0
      %s192 = scalar_select %p191, %s20, 0
      %s193 = sadd.s32 %s192, %s190
      %s194 = smul.addr %s193, 8
      %s195 = scalar_lea.vmem %s1, %s194
      %p196 = pneg %p78
      %p197 = pneg %p75
      %p198 = pneg %p106
      %p199 = pneg %p103
      %p200 = scmp.lt.s32.totalorder %s19, 1
      %s201 = scalar_select %p200, %s19, 1
      %p202 = scmp.lt.s32.totalorder %s20, 0
      %s203 = scalar_select %p202, %s20, 0
      %s204 = sadd.s32 %s203, %s201
      %s205 = smul.addr %s204, 8
      %s206 = scalar_lea.vmem %s2, %s205
      %p207 = pneg %p134
      %p208 = pneg %p131
      %p209 = scmp.lt.s32.totalorder %s19, 1
      %s210 = scalar_select %p209, %s19, 1
      %p211 = scmp.lt.s32.totalorder %s20, 0
      %s212 = scalar_select %p211, %s20, 0
      %s213 = sadd.s32 %s212, %s210
      %s214 = smul.addr %s213, 8
      %s215 = scalar_lea.vmem %s3, %s214
      %p216 = scmp.lt.s32.totalorder %s19, 1
      %s217 = scalar_select %p216, %s19, 1
      %p218 = scmp.lt.s32.totalorder %s20, 0
      %s219 = scalar_select %p218, %s20, 0
      %s220 = sadd.s32 %s219, %s217
      %s221 = smul.addr %s220, 8
      %s222 = scalar_lea.vmem %s0, %s221
      %p223 = scmp.lt.s32.totalorder %s19, 1
      %s224 = scalar_select %p223, %s19, 1
      %p225 = scmp.lt.s32.totalorder %s20, 0
      %s226 = scalar_select %p225, %s20, 0
      %s227 = sadd.s32 %s226, %s224
      %s228 = smul.addr %s227, 8
      %s229 = scalar_lea.vmem %s1, %s228
      %p230 = scmp.lt.s32.totalorder %s19, 1
      %s231 = scalar_select %p230, %s19, 1
      %p232 = scmp.lt.s32.totalorder %s20, 0
      %s233 = scalar_select %p232, %s20, 0
      %s234 = sadd.s32 %s233, %s231
      %s235 = smul.addr %s234, 8
      %s236 = scalar_lea.vmem %s2, %s235
      %p237 = scmp.lt.s32.totalorder %s19, 1
      %s238 = scalar_select %p237, %s19, 1
      %p239 = scmp.lt.s32.totalorder %s20, 0
      %s240 = scalar_select %p239, %s20, 0
      %s241 = sadd.s32 %s240, %s238
      %s242 = smul.addr %s241, 8
      %s243 = scalar_lea.vmem %s3, %s242
      %v244 = vld [vmem:[%s222] sm:$0xff]
      %v245 = vld [vmem:[%s229] sm:$0xff]
      %v246 = vrot.slane %v244, 4
      %v247 = vadd.f32 %v244, %v246
      %v248 = vrot.slane %v247, 2
      %v249 = vadd.f32 %v247, %v248
      %v250 = vrot.slane %v249, 1
      %v251 = vadd.f32 %v249, %v250
      %v252 = vrot.slane %v245, 4
      %v253 = vadd.f32 %v245, %v252
      %v254 = vrot.slane %v253, 2
      %v255 = vadd.f32 %v253, %v254
      %v256 = vrot.slane %v255, 1
      %v257 = vadd.f32 %v255, %v256
      %v258 = vmul.f32 %v244, %v244
      %v259 = vrot.slane %v258, 4
      %v260 = vadd.f32 %v258, %v259
      %v261 = vrot.slane %v260, 2
      %v262 = vadd.f32 %v260, %v261
      %v263 = vrot.slane %v262, 1
      %v264 = vadd.f32 %v262, %v263
      %v265 = vmul.f32 %v245, %v245
      %v266 = vrot.slane %v265, 4
      %v267 = vadd.f32 %v265, %v266
      %v268 = vrot.slane %v267, 2
      %v269 = vadd.f32 %v267, %v268
      %v270 = vrot.slane %v269, 1
      %v271 = vadd.f32 %v269, %v270
      %v272 = vmul.f32 %v244, %v245
      %v273 = vrot.slane %v272, 4
      %v274 = vadd.f32 %v272, %v273
      %v275 = vrot.slane %v274, 2
      %v276 = vadd.f32 %v274, %v275
      %v277 = vrot.slane %v276, 1
      %v278 = vadd.f32 %v276, %v277
      %279 = vrot.lane.b32.xlu0 %v251, 4
      %v280 = vpop.permute.xlu0 %279
      %v281 = vadd.f32 %v251, %v280
      %282 = vrot.lane.b32.xlu0 %v281, 8
      %v283 = vpop.permute.xlu0 %282
      %v284 = vadd.f32 %v281, %v283
      %285 = vrot.lane.b32.xlu0 %v284, 16
      %v286 = vpop.permute.xlu0 %285
      %v287 = vadd.f32 %v284, %v286
      %288 = vrot.lane.b32.xlu0 %v287, 32
      %v289 = vpop.permute.xlu0 %288
      %v290 = vadd.f32 %v287, %v289
      %291 = vrot.lane.b32.xlu0 %v290, 64
      %v292 = vpop.permute.xlu0 %291
      %v293 = vadd.f32 %v290, %v292
      %294 = vrot.lane.b32.xlu0 %v257, 4
      %v295 = vpop.permute.xlu0 %294
      %v296 = vadd.f32 %v257, %v295
      %297 = vrot.lane.b32.xlu0 %v296, 8
      %v298 = vpop.permute.xlu0 %297
      %v299 = vadd.f32 %v296, %v298
      %300 = vrot.lane.b32.xlu0 %v299, 16
      %v301 = vpop.permute.xlu0 %300
      %v302 = vadd.f32 %v299, %v301
      %303 = vrot.lane.b32.xlu0 %v302, 32
      %v304 = vpop.permute.xlu0 %303
      %v305 = vadd.f32 %v302, %v304
      %306 = vrot.lane.b32.xlu0 %v305, 64
      %v307 = vpop.permute.xlu0 %306
      %v308 = vadd.f32 %v305, %v307
      %309 = vrot.lane.b32.xlu0 %v264, 4
      %v310 = vpop.permute.xlu0 %309
      %v311 = vadd.f32 %v264, %v310
      %312 = vrot.lane.b32.xlu0 %v311, 8
      %v313 = vpop.permute.xlu0 %312
      %v314 = vadd.f32 %v311, %v313
      %315 = vrot.lane.b32.xlu0 %v314, 16
      %v316 = vpop.permute.xlu0 %315
      %v317 = vadd.f32 %v314, %v316
      %318 = vrot.lane.b32.xlu0 %v317, 32
      %v319 = vpop.permute.xlu0 %318
      %v320 = vadd.f32 %v317, %v319
      %321 = vrot.lane.b32.xlu0 %v320, 64
      %v322 = vpop.permute.xlu0 %321
      %v323 = vadd.f32 %v320, %v322
      %324 = vrot.lane.b32.xlu0 %v271, 4
      %v325 = vpop.permute.xlu0 %324
      %v326 = vadd.f32 %v271, %v325
      %327 = vrot.lane.b32.xlu0 %v326, 8
      %v328 = vpop.permute.xlu0 %327
      %v329 = vadd.f32 %v326, %v328
      %330 = vrot.lane.b32.xlu0 %v329, 16
      %v331 = vpop.permute.xlu0 %330
      %v332 = vadd.f32 %v329, %v331
      %333 = vrot.lane.b32.xlu0 %v332, 32
      %v334 = vpop.permute.xlu0 %333
      %v335 = vadd.f32 %v332, %v334
      %336 = vrot.lane.b32.xlu0 %v335, 64
      %v337 = vpop.permute.xlu0 %336
      %v338 = vadd.f32 %v335, %v337
      %339 = vrot.lane.b32.xlu0 %v278, 4
      %v340 = vpop.permute.xlu0 %339
      %v341 = vadd.f32 %v278, %v340
      %342 = vrot.lane.b32.xlu0 %v341, 8
      %v343 = vpop.permute.xlu0 %342
      %v344 = vadd.f32 %v341, %v343
      %345 = vrot.lane.b32.xlu0 %v344, 16
      %v346 = vpop.permute.xlu0 %345
      %v347 = vadd.f32 %v344, %v346
      %348 = vrot.lane.b32.xlu0 %v347, 32
      %v349 = vpop.permute.xlu0 %348
      %v350 = vadd.f32 %v347, %v349
      %351 = vrot.lane.b32.xlu0 %v350, 64
      %v352 = vpop.permute.xlu0 %351
      %v353 = vadd.f32 %v350, %v352
      %v354 = vmul.f32 %v293, 0.00390625
      %v355 = vmul.f32 %v308, 0.00390625
      %v356 = vmul.f32 %v323, 0.00390625
      %v357 = vmul.f32 %v354, %v354
      %v358 = vsub.f32 %v356, %v357
      %v359 = vmax.f32 %v358, 0.0
      %v360 = vadd.f32 %v359, 1e-05
      %v361 = vmul.f32 %v338, 0.00390625
      %v362 = vmul.f32 %v355, %v355
      %v363 = vsub.f32 %v361, %v362
      %v364 = vmax.f32 %v363, 0.0
      %v365 = vadd.f32 %v364, 1e-05
      %v366 = vmul.f32 %v353, 0.00390625
      %v367 = vmul.f32 %v354, %v355
      %v368 = vsub.f32 %v366, %v367
      %v369 = vmul.f32 %v360, %v365
      %v370 = vmul.f32 %v368, %v368
      %v371 = vsub.f32 %v369, %v370
      %v372 = vmax.f32 %v371, 1e-37
      %v373 = vrsqrt.pop %v372
      %v374 = vmul.f32 %v372, %v373
      %v375 = vadd.f32 %v360, %v365
      %v376 = vmul.f32 %v374, 2.0
      %v377 = vadd.f32 %v375, %v376
      %v378 = vrsqrt.pop %v377
      %v379 = vmul.f32 %v373, %v378
      %v380 = vadd.f32 %v365, %v374
      %v381 = vmul.f32 %v380, %v379
      %v382 = vadd.f32 %v360, %v374
      %v383 = vmul.f32 %v382, %v379
      %v384 = vsub.f32 0.0, %v368
      %v385 = vmul.f32 %v384, %v379
      %v386 = vlaneseq
      %v387 = vshrl.u32 %v386, 7
      %v388 = vsub.s32 0, %v387
      %v389 = vrot.slane %v354, %v388
      %v390 = vsub.f32 %v244, %v389
      %v391 = vlaneseq
      %v392 = vshrl.u32 %v391, 7
      %v393 = vsub.s32 0, %v392
      %v394 = vrot.slane %v355, %v393
      %v395 = vsub.f32 %v245, %v394
      %v396 = vlaneseq
      %v397 = vshrl.u32 %v396, 7
      %v398 = vsub.s32 0, %v397
      %v399 = vrot.slane %v381, %v398
      %v400 = vmul.f32 %v390, %v399
      %v401 = vlaneseq
      %v402 = vshrl.u32 %v401, 7
      %v403 = vsub.s32 0, %v402
      %v404 = vrot.slane %v385, %v403
      %v405 = vmul.f32 %v395, %v404
      %v406 = vadd.f32 %v400, %v405
      %407 = vst [vmem:[%s236] sm:$0xff] %v406
      %v408 = vmul.f32 %v390, %v404
      %v409 = vlaneseq
      %v410 = vshrl.u32 %v409, 7
      %v411 = vsub.s32 0, %v410
      %v412 = vrot.slane %v383, %v411
      %v413 = vmul.f32 %v395, %v412
      %v414 = vadd.f32 %v408, %v413
      %415 = vst [vmem:[%s243] sm:$0xff] %v414
      %p416 = scmp.lt.s32.totalorder %s19, 1
      %s417 = scalar_select %p416, %s19, 1
      %p418 = scmp.lt.s32.totalorder %s20, 0
      %s419 = scalar_select %p418, %s20, 0
      %s420 = sadd.s32 %s419, %s417
      %s421 = smul.addr %s420, 8
      %s422 = scalar_lea.vmem %s2, %s421
      %p423 = scmp.lt.s32.totalorder %s19, 1
      %s424 = scalar_select %p423, %s19, 1
      %p425 = scmp.lt.s32.totalorder %s20, 0
      %s426 = scalar_select %p425, %s20, 0
      %s427 = sadd.s32 %s426, %s424
      %s428 = smul.addr %s427, 8
      %s429 = scalar_lea.vmem %s3, %s428
      // Predicated region
      $region29: #{complex_normalization.1} parent=27 // pred_check
        %p430 = pneg %p103
      $region30: #{complex_normalization.1} parent=27 // pred_check_branch
        %432 = sbr.rel (%p430) target = $region32
      $region31: #{complex_normalization.1} parent=27 // pred_region
        _
      $region32: #{complex_normalization.1} parent=27 // pred_fallthru
        _
      // Predicated region
      $region33: #{complex_normalization.1} parent=27 // pred_check
        %p433 = pneg %p131
      $region34: #{complex_normalization.1} parent=27 // pred_check_branch
        %435 = sbr.rel (%p433) target = $region36
      $region35: #{complex_normalization.1} parent=27 // pred_region
        _
      $region36: #{complex_normalization.1} parent=27 // pred_fallthru
        _
    $region28: #{complex_normalization.1} parent=5 // pred_fallthru
      _
    %p436 = scmp.le.s32.totalorder 2, %s10
    // Predicated region
    $region37: #{complex_normalization.1} parent=5 // pred_check
      %p437 = pneg %p436
    $region38: #{complex_normalization.1} parent=5 // pred_check_branch
      %439 = sbr.rel (%p437) target = $region40
    $region39: #{complex_normalization.1} parent=5 // pred_region
      %s440 = ssub.s32 %s10, 2
      // Predicated region
      $region41: #{complex_normalization.1} parent=39 // pred_check
        %p441 = pneg %p109
      $region42: #{complex_normalization.1} parent=39 // pred_check_branch
        %443 = sbr.rel (%p441) target = $region44
      $region43: #{complex_normalization.1} parent=39 // pred_region
        %p444 = scmp.lt.s32.totalorder %s21, 1
        %s445 = scalar_select %p444, %s21, 1
        %p446 = scmp.lt.s32.totalorder %s22, 0
        %s447 = scalar_select %p446, %s22, 0
        %s448 = sadd.s32 %s447, %s445
        %s449 = smul.addr %s448, 8
        %s450 = scalar_lea.vmem %s2, %s449
      $region44: #{complex_normalization.1} parent=39 // pred_fallthru
        _
      // Predicated region
      $region45: #{complex_normalization.1} parent=39 // pred_check
        %p451 = pneg %p137
      $region46: #{complex_normalization.1} parent=39 // pred_check_branch
        %453 = sbr.rel (%p451) target = $region48
      $region47: #{complex_normalization.1} parent=39 // pred_region
        %p454 = scmp.lt.s32.totalorder %s21, 1
        %s455 = scalar_select %p454, %s21, 1
        %p456 = scmp.lt.s32.totalorder %s22, 0
        %s457 = scalar_select %p456, %s22, 0
        %s458 = sadd.s32 %s457, %s455
        %s459 = smul.addr %s458, 8
        %s460 = scalar_lea.vmem %s3, %s459
      $region48: #{complex_normalization.1} parent=39 // pred_fallthru
        _
    $region40: #{complex_normalization.1} parent=5 // pred_fallthru
      _
  $region6: #{complex_normalization.1} parent=0 // loop_footer
    %s14 = sadd.s32 1, %s10
  $region7: #{complex_normalization.1} parent=0 // loop_footer_branch
    %9 = sbr.rel target = $region3
  $region8: #{complex_normalization.1} parent=0 // loop_exit
    _

</llo_original>
